<compile_context>
chip_gen: v7x
topology: tpu7x:2x2x1
jax: 0.10.0
libtpu: 0.0.40
codegen_flags: <defaults>
</compile_context>

<pallas_src>
import jax
import jax.numpy as jnp
from jax.experimental import pallas as pl
from jax.experimental.pallas import tpu as pltpu

LANE = 128
SUBLANE = 8


def _round_up(x, m):
    return ((x + m - 1) // m) * m


def decoder_kernel(z_ref, w1_ref, b1_ref, w2_ref, b2_ref, w3_ref, b3_ref, out_ref):
    neg_slope = 0.15

    # Layer 1: Linear(latent -> hidden) + LeakyReLU(0.15), f32 accumulation on MXU.
    h = jnp.dot(z_ref[...].astype(w1_ref.dtype), w1_ref[...],
                preferred_element_type=jnp.float32) + b1_ref[...]
    h = jnp.maximum(h, neg_slope * h)

    # Layer 2: Linear(hidden -> hidden) + LeakyReLU(0.15).
    h = jnp.dot(h.astype(w2_ref.dtype), w2_ref[...],
                preferred_element_type=jnp.float32) + b2_ref[...]
    h = jnp.maximum(h, neg_slope * h)

    # Layer 3: Linear(hidden -> output) + sigmoid.
    # exp -> EUP, approx reciprocal -> EUP (no VPU divide).
    o = jnp.dot(h.astype(w3_ref.dtype), w3_ref[...],
                preferred_element_type=jnp.float32) + b3_ref[...]
    out_ref[...] = pl.reciprocal(1.0 + jnp.exp(-o), approx=True)


def decoder_forward(z, params, *, block_m=256, weight_dtype=None):
    """z: (B, latent_dim) f32.  params: dict of pre-transposed weights/biases.

    Weights are (in_features, out_features); biases are (1, out_features).
    Set weight_dtype=jnp.bfloat16 on v6e/v7x to halve weight HBM traffic
    (matmuls still accumulate in f32).
    """
    w1, b1 = params["w1"], params["b1"]
    w2, b2 = params["w2"], params["b2"]
    w3, b3 = params["w3"], params["b3"]

    B, latent_dim = z.shape
    hidden_dim = w1.shape[1]
    output_dim = w3.shape[1]

    if weight_dtype is None:
        weight_dtype = w1.dtype

    # Hardware-aligned (padded) dims.
    L = _round_up(latent_dim, LANE)
    H = _round_up(hidden_dim, LANE)
    O = _round_up(output_dim, LANE)
    tm = min(block_m, _round_up(B, SUBLANE))   # batch tile (multiple of 8 sublanes)
    Bp = _round_up(B, tm)
    grid = (pl.cdiv(Bp, tm),)

    def pad2(a, rows, cols, dt=None):
        if dt is not None:
            a = a.astype(dt)
        return jnp.pad(a, ((0, rows - a.shape[0]), (0, cols - a.shape[1])))

    zp = pad2(z, Bp, L)
    w1p, b1p = pad2(w1, L, H, weight_dtype), pad2(b1, 1, H)
    w2p, b2p = pad2(w2, H, H, weight_dtype), pad2(b2, 1, H)
    w3p, b3p = pad2(w3, H, O, weight_dtype), pad2(b3, 1, O)

    # VMEM budget: resident weights/biases + pipelined activation tiles + work.
    wbytes = jnp.dtype(weight_dtype).itemsize
    resident = (w1p.size + w2p.size + w3p.size) * wbytes \
             + (b1p.size + b2p.size + b3p.size) * 4
    streamed = 2 * (tm * L + tm * O) * 4          # double-buffered z / out tiles
    work = tm * (2 * H + O) * 4                   # intermediates
    vmem_limit = int(min(max(2 * (resident + streamed + work), 16 * 2**20),
                         48 * 2**20))

    cost = pl.CostEstimate(
        flops=int(2 * Bp * (L * H + H * H + H * O) + 4 * Bp * H + 2 * Bp * O),
        transcendentals=int(2 * Bp * O),
        bytes_accessed=int(zp.size * 4 + resident + Bp * O * 4),
    )

    out = pl.pallas_call(
        decoder_kernel,
        out_shape=jax.ShapeDtypeStruct((Bp, O), jnp.float32),
        grid=grid,
        in_specs=[
            pl.BlockSpec((tm, L), lambda i: (i, 0)),   # z tile (streamed)
            pl.BlockSpec((L, H), lambda i: (0, 0)),    # W1 (resident)
            pl.BlockSpec((1, H), lambda i: (0, 0)),    # b1
            pl.BlockSpec((H, H), lambda i: (0, 0)),    # W2
            pl.BlockSpec((1, H), lambda i: (0, 0)),    # b2
            pl.BlockSpec((H, O), lambda i: (0, 0)),    # W3
            pl.BlockSpec((1, O), lambda i: (0, 0)),    # b3
        ],
        out_specs=pl.BlockSpec((tm, O), lambda i: (i, 0)),  # lane-dense output
        compiler_params=pltpu.CompilerParams(
            dimension_semantics=("parallel",),
            vmem_limit_bytes=vmem_limit,
        ),
        cost_estimate=cost,
    )(zp, w1p, b1p, w2p, b2p, w3p, b3p)

    # Strip the batch / lane padding.
    return out[:B, :output_dim]


def init_decoder_params(key, latent_dim, hidden_dim, output_dim):
    """Deterministic init mimicking PyTorch nn.Linear default (uniform ±1/sqrt(fan_in)).

    Weights are stored already transposed to (in_features, out_features)."""
    def linear(k, fan_in, fan_out):
        kw, kb = jax.random.split(k)
        bound = 1.0 / jnp.sqrt(fan_in)
        w = jax.random.uniform(kw, (fan_in, fan_out), jnp.float32, -bound, bound)
        b = jax.random.uniform(kb, (1, fan_out), jnp.float32, -bound, bound)
        return w, b

    k1, k2, k3 = jax.random.split(key, 3)
    w1, b1 = linear(k1, latent_dim, hidden_dim)
    w2, b2 = linear(k2, hidden_dim, hidden_dim)
    w3, b3 = linear(k3, hidden_dim, output_dim)
    return {"w1": w1, "b1": b1, "w2": w2, "b2": b2, "w3": w3, "b3": b3}


def decoder_reference(z, params):
    """Pure-JAX reference for correctness checking."""
    def leaky(x):
        return jnp.where(x >= 0, x, 0.15 * x)

    h = leaky(z @ params["w1"] + params["b1"])
    h = leaky(h @ params["w2"] + params["b2"])
    return jax.nn.sigmoid(h @ params["w3"] + params["b3"])


if __name__ == "__main__":
    latent_dim, hidden_dim, output_dim = 16, 32, 64
    batch = 8

    key = jax.random.PRNGKey(0)
    k_params, k_z = jax.random.split(key)
    params = init_decoder_params(k_params, latent_dim, hidden_dim, output_dim)
    z = jax.random.normal(k_z, (batch, latent_dim), jnp.float32)

    out = decoder_forward(z, params)
    out = jax.block_until_ready(out)

    ref = decoder_reference(z, params)
    assert out.shape == (batch, output_dim), out.shape
    # approx EUP reciprocal in the sigmoid -> allow a small tolerance.
    err = float(jnp.max(jnp.abs(out - ref)))
    assert jnp.allclose(out, ref, atol=5e-3, rtol=5e-3), f"mismatch vs reference: {err}"

    print("KERNEL_OK")
</pallas_src>

<mosaic_0001>
module attributes {stable_mosaic.version = 11 : i64} {
  func.func @decoder_kernel(%arg0: i32, %arg1: memref<8x128xf32, #tpu.memory_space<vmem>>, %arg2: memref<128x128xf32, #tpu.memory_space<vmem>>, %arg3: memref<1x128xf32, #tpu.memory_space<vmem>>, %arg4: memref<128x128xf32, #tpu.memory_space<vmem>>, %arg5: memref<1x128xf32, #tpu.memory_space<vmem>>, %arg6: memref<128x128xf32, #tpu.memory_space<vmem>>, %arg7: memref<1x128xf32, #tpu.memory_space<vmem>>, %arg8: memref<8x128xf32, #tpu.memory_space<vmem>>) attributes {dimension_semantics = [#tpu.dimension_semantics<parallel>], iteration_bounds = array<i64: 1>, scalar_prefetch = 0 : i64, scratch_operands = 0 : i64, tpu.core_type = #tpu.core_type<tc>, window_params = [{transform_indices = @transform_0, window_bounds = array<i64: 8, 128>}, {pipeline_mode = #tpu.pipeline_mode<synchronous>, transform_indices = @transform_1, window_bounds = array<i64: 128, 128>}, {pipeline_mode = #tpu.pipeline_mode<synchronous>, transform_indices = @transform_2, window_bounds = array<i64: 1, 128>}, {pipeline_mode = #tpu.pipeline_mode<synchronous>, transform_indices = @transform_3, window_bounds = array<i64: 128, 128>}, {pipeline_mode = #tpu.pipeline_mode<synchronous>, transform_indices = @transform_4, window_bounds = array<i64: 1, 128>}, {pipeline_mode = #tpu.pipeline_mode<synchronous>, transform_indices = @transform_5, window_bounds = array<i64: 128, 128>}, {pipeline_mode = #tpu.pipeline_mode<synchronous>, transform_indices = @transform_6, window_bounds = array<i64: 1, 128>}, {transform_indices = @transform_7, window_bounds = array<i64: 8, 128>}]} {
    %c0 = arith.constant 0 : index
    %c0_0 = arith.constant 0 : index
    %0 = vector.load %arg1[%c0, %c0_0] : memref<8x128xf32, #tpu.memory_space<vmem>>, vector<8x128xf32>
    %c0_1 = arith.constant 0 : index
    %c0_2 = arith.constant 0 : index
    %1 = vector.load %arg2[%c0_1, %c0_2] : memref<128x128xf32, #tpu.memory_space<vmem>>, vector<128x128xf32>
    %cst = arith.constant dense<0.000000e+00> : vector<8x128xf32>
    %2 = tpu.matmul %0, %1, %cst {dimension_numbers = #tpu.dot_dimension_numbers<[1], [0], [0], [1], [0, 0, 1, 1], [], []>} : vector<8x128xf32>, vector<128x128xf32>, vector<8x128xf32> -> vector<8x128xf32>
    %c0_3 = arith.constant 0 : index
    %c0_4 = arith.constant 0 : index
    %3 = vector.load %arg3[%c0_3, %c0_4] : memref<1x128xf32, #tpu.memory_space<vmem>>, vector<1x128xf32>
    %4 = vector.broadcast %3 : vector<1x128xf32> to vector<8x128xf32>
    %5 = arith.addf %2, %4 : vector<8x128xf32>
    %cst_5 = arith.constant 1.500000e-01 : f32
    %6 = vector.broadcast %cst_5 : f32 to vector<8x128xf32>
    %7 = arith.mulf %6, %5 : vector<8x128xf32>
    %8 = arith.maximumf %5, %7 : vector<8x128xf32>
    %c0_6 = arith.constant 0 : index
    %c0_7 = arith.constant 0 : index
    %9 = vector.load %arg4[%c0_6, %c0_7] : memref<128x128xf32, #tpu.memory_space<vmem>>, vector<128x128xf32>
    %cst_8 = arith.constant dense<0.000000e+00> : vector<8x128xf32>
    %10 = tpu.matmul %8, %9, %cst_8 {dimension_numbers = #tpu.dot_dimension_numbers<[1], [0], [0], [1], [0, 0, 1, 1], [], []>} : vector<8x128xf32>, vector<128x128xf32>, vector<8x128xf32> -> vector<8x128xf32>
    %c0_9 = arith.constant 0 : index
    %c0_10 = arith.constant 0 : index
    %11 = vector.load %arg5[%c0_9, %c0_10] : memref<1x128xf32, #tpu.memory_space<vmem>>, vector<1x128xf32>
    %12 = vector.broadcast %11 : vector<1x128xf32> to vector<8x128xf32>
    %13 = arith.addf %10, %12 : vector<8x128xf32>
    %cst_11 = arith.constant 1.500000e-01 : f32
    %14 = vector.broadcast %cst_11 : f32 to vector<8x128xf32>
    %15 = arith.mulf %14, %13 : vector<8x128xf32>
    %16 = arith.maximumf %13, %15 : vector<8x128xf32>
    %c0_12 = arith.constant 0 : index
    %c0_13 = arith.constant 0 : index
    %17 = vector.load %arg6[%c0_12, %c0_13] : memref<128x128xf32, #tpu.memory_space<vmem>>, vector<128x128xf32>
    %cst_14 = arith.constant dense<0.000000e+00> : vector<8x128xf32>
    %18 = tpu.matmul %16, %17, %cst_14 {dimension_numbers = #tpu.dot_dimension_numbers<[1], [0], [0], [1], [0, 0, 1, 1], [], []>} : vector<8x128xf32>, vector<128x128xf32>, vector<8x128xf32> -> vector<8x128xf32>
    %c0_15 = arith.constant 0 : index
    %c0_16 = arith.constant 0 : index
    %19 = vector.load %arg7[%c0_15, %c0_16] : memref<1x128xf32, #tpu.memory_space<vmem>>, vector<1x128xf32>
    %20 = vector.broadcast %19 : vector<1x128xf32> to vector<8x128xf32>
    %21 = arith.addf %18, %20 : vector<8x128xf32>
    %cst_17 = arith.constant 0.000000e+00 : f32
    %22 = vector.broadcast %cst_17 : f32 to vector<8x128xf32>
    %23 = arith.subf %22, %21 : vector<8x128xf32>
    %24 = math.exp %23 : vector<8x128xf32>
    %cst_18 = arith.constant 1.000000e+00 : f32
    %25 = vector.broadcast %cst_18 : f32 to vector<8x128xf32>
    %26 = arith.addf %25, %24 : vector<8x128xf32>
    %27 = tpu.reciprocal %26 {approx = true} : vector<8x128xf32> -> vector<8x128xf32>
    %c0_19 = arith.constant 0 : index
    %c0_20 = arith.constant 0 : index
    %28 = vector.load %arg8[%c0_19, %c0_20] : memref<8x128xf32, #tpu.memory_space<vmem>>, vector<8x128xf32>
    tpu.vector_store %arg8[%c0_19, %c0_20], %27 {strides = array<i32>} : memref<8x128xf32, #tpu.memory_space<vmem>>, vector<8x128xf32>,
    return
  }
  func.func @transform_0(%arg0: i32) -> (i32, i32) {
    %c0_i32 = arith.constant 0 : i32
    %c0_i32_0 = arith.constant 0 : i32
    return %arg0, %c0_i32 : i32, i32
  }
  func.func @transform_1(%arg0: i32) -> (i32, i32) {
    %c0_i32 = arith.constant 0 : i32
    %c0_i32_0 = arith.constant 0 : i32
    %c0_i32_1 = arith.constant 0 : i32
    return %c0_i32, %c0_i32_0 : i32, i32
  }
  func.func @transform_2(%arg0: i32) -> (i32, i32) {
    %c0_i32 = arith.constant 0 : i32
    %c0_i32_0 = arith.constant 0 : i32
    %c0_i32_1 = arith.constant 0 : i32
    return %c0_i32, %c0_i32_0 : i32, i32
  }
  func.func @transform_3(%arg0: i32) -> (i32, i32) {
    %c0_i32 = arith.constant 0 : i32
    %c0_i32_0 = arith.constant 0 : i32
    %c0_i32_1 = arith.constant 0 : i32
    return %c0_i32, %c0_i32_0 : i32, i32
  }
  func.func @transform_4(%arg0: i32) -> (i32, i32) {
    %c0_i32 = arith.constant 0 : i32
    %c0_i32_0 = arith.constant 0 : i32
    %c0_i32_1 = arith.constant 0 : i32
    return %c0_i32, %c0_i32_0 : i32, i32
  }
  func.func @transform_5(%arg0: i32) -> (i32, i32) {
    %c0_i32 = arith.constant 0 : i32
    %c0_i32_0 = arith.constant 0 : i32
    %c0_i32_1 = arith.constant 0 : i32
    return %c0_i32, %c0_i32_0 : i32, i32
  }
  func.func @transform_6(%arg0: i32) -> (i32, i32) {
    %c0_i32 = arith.constant 0 : i32
    %c0_i32_0 = arith.constant 0 : i32
    %c0_i32_1 = arith.constant 0 : i32
    return %c0_i32, %c0_i32_0 : i32, i32
  }
  func.func @transform_7(%arg0: i32) -> (i32, i32) {
    %c0_i32 = arith.constant 0 : i32
    %c0_i32_0 = arith.constant 0 : i32
    return %arg0, %c0_i32 : i32, i32
  }
}

</mosaic_0001>

<llo_original>
// kernel: tpu_custom_call.1
$region0: #{tpu_custom_call.1}
  #allocation0 [shape = 'u32[]', space=smem, size = 0x4, offset = 0x4, fixed_abs, tag = 'smem constant byte address 0x4 - core index']
  #allocation1 [shape = 'u32[144,128]{1,0:T(1,128)}', space=vmem, size = 0x12000, scoped, tag = 'internal scratch']
  %s0 = inlined_call_operand.hbm [shape: f32[8,128], index: 0, kind: input, shape index: {}]
  %s1 = inlined_call_operand.hbm [shape: f32[128,128], index: 1, kind: input, shape index: {}]
  %s2 = inlined_call_operand.vmem [shape: f32[1,128], index: 2, kind: input, shape index: {}]
  %s3 = inlined_call_operand.hbm [shape: f32[128,128], index: 3, kind: input, shape index: {}]
  %s4 = inlined_call_operand.vmem [shape: f32[1,128], index: 4, kind: input, shape index: {}]
  %s5 = inlined_call_operand.hbm [shape: f32[128,128], index: 5, kind: input, shape index: {}]
  %s6 = inlined_call_operand.vmem [shape: f32[1,128], index: 6, kind: input, shape index: {}]
  %s7 = inlined_call_operand.hbm [shape: f32[8,128], index: 7, kind: output, shape index: {}]
  %s8 = sld [smem:[#allocation0]]
  $region54: #{tpu_custom_call.1} parent=0
    _
  %s10 = ssub.s32 1, %s8
  %s11 = scalar_select 0, %s10, %s8
  $region1: #{tpu_custom_call.1} parent=0
    #allocation2 [shape = 'u8[4096]{0}', space=vmem, size = 0x1000, scoped, tag = 'input window, operand 0, single buffered']
    #allocation3 [shape = 's32[1]{0}', space=sflag, size = 0x4, scoped, tag = 'scoped memory for tpu_custom_call.1']
    #allocation4 [shape = 's32[1]{0}', space=sflag, size = 0x4, scoped, tag = 'scoped memory for tpu_custom_call.1']
    #allocation5 [shape = 'u8[65536]{0}', space=vmem, size = 0x10000, scoped, tag = 'input window, operand 1, single buffered']
    #allocation6 [shape = 's32[1]{0}', space=sflag, size = 0x4, scoped, tag = 'scoped memory for tpu_custom_call.1']
    #allocation7 [shape = 'u8[65536]{0}', space=vmem, size = 0x10000, scoped, tag = 'input window, operand 3, single buffered']
    #allocation8 [shape = 'u8[65536]{0}', space=vmem, size = 0x10000, scoped, tag = 'input window, operand 5, single buffered']
    #allocation9 [shape = 's32[1]{0}', space=sflag, size = 0x4, scoped, tag = 'scoped memory for tpu_custom_call.1']
    #allocation10 [shape = 'u8[4096]{0}', space=vmem, size = 0x1000, scoped, tag = 'output window, operand 0, single buffered']
    %12 = vsyncpa [#allocation3], 0
    %13 = vsyncpa [#allocation6], 0
    %14 = vsyncpa [#allocation9], 0
    %15 = vsyncpa [#allocation4], 0
    // Predicated region
    $region2: #{tpu_custom_call.1} parent=1 // pred_check
      _
    $region3: #{tpu_custom_call.1} parent=1 // pred_check_branch
      %17 = sbr.rel (0) target = $region5
    $region4: #{tpu_custom_call.1} parent=1 // pred_region
      %s19 = ssub.s32 128, 128
      %20 = vsyncadd [#allocation3], %s19
      %s22 = sshll.u32 [#allocation2], 4
      %s23 = int_to_ptr.vmem [resolvable:$true] %s22
      %25 = dma.hbm_to_vmem [thread:$0]  %s0, 128, %s23, [#allocation3]
    $region5: #{tpu_custom_call.1} parent=1 // pred_fallthru
      _
    // Predicated region
    $region6: #{tpu_custom_call.1} parent=1 // pred_check
      _
    $region7: #{tpu_custom_call.1} parent=1 // pred_check_branch
      %27 = sbr.rel (0) target = $region9
    $region8: #{tpu_custom_call.1} parent=1 // pred_region
      %s29 = ssub.s32 2048, 2048
      %30 = vsyncadd [#allocation6], %s29
      %s31 = sshll.u32 [#allocation5], 4
      %s32 = int_to_ptr.vmem [resolvable:$true] %s31
      %37 = dma.hbm_to_vmem [thread:$0]  %s1, 2048, %s32, [#allocation6], 128, 128, 8
    $region9: #{tpu_custom_call.1} parent=1 // pred_fallthru
      _
    // Predicated region
    $region10: #{tpu_custom_call.1} parent=1 // pred_check
      _
    $region11: #{tpu_custom_call.1} parent=1 // pred_check_branch
      %39 = sbr.rel (0) target = $region13
    $region12: #{tpu_custom_call.1} parent=1 // pred_region
      _
    $region13: #{tpu_custom_call.1} parent=1 // pred_fallthru
      _
    // Predicated region
    $region14: #{tpu_custom_call.1} parent=1 // pred_check
      _
    $region15: #{tpu_custom_call.1} parent=1 // pred_check_branch
      %41 = sbr.rel (0) target = $region17
    $region16: #{tpu_custom_call.1} parent=1 // pred_region
      %s43 = ssub.s32 2048, 2048
      %44 = vsyncadd [#allocation6], %s43
      %s45 = sshll.u32 [#allocation7], 4
      %s46 = int_to_ptr.vmem [resolvable:$true] %s45
      %51 = dma.hbm_to_vmem [thread:$0]  %s3, 2048, %s46, [#allocation6], 128, 128, 8
    $region17: #{tpu_custom_call.1} parent=1 // pred_fallthru
      _
    // Predicated region
    $region18: #{tpu_custom_call.1} parent=1 // pred_check
      _
    $region19: #{tpu_custom_call.1} parent=1 // pred_check_branch
      %53 = sbr.rel (0) target = $region21
    $region20: #{tpu_custom_call.1} parent=1 // pred_region
      _
    $region21: #{tpu_custom_call.1} parent=1 // pred_fallthru
      _
    // Predicated region
    $region22: #{tpu_custom_call.1} parent=1 // pred_check
      _
    $region23: #{tpu_custom_call.1} parent=1 // pred_check_branch
      %55 = sbr.rel (0) target = $region25
    $region24: #{tpu_custom_call.1} parent=1 // pred_region
      %s57 = ssub.s32 2048, 2048
      %58 = vsyncadd [#allocation9], %s57
      %s59 = sshll.u32 [#allocation8], 4
      %s60 = int_to_ptr.vmem [resolvable:$true] %s59
      %65 = dma.hbm_to_vmem [thread:$0]  %s5, 2048, %s60, [#allocation9], 128, 128, 8
    $region25: #{tpu_custom_call.1} parent=1 // pred_fallthru
      _
    // Predicated region
    $region26: #{tpu_custom_call.1} parent=1 // pred_check
      _
    $region27: #{tpu_custom_call.1} parent=1 // pred_check_branch
      %67 = sbr.rel (0) target = $region29
    $region28: #{tpu_custom_call.1} parent=1 // pred_region
      _
    $region29: #{tpu_custom_call.1} parent=1 // pred_fallthru
      _
    // Predicated region
    $region30: #{tpu_custom_call.1} parent=1 // pred_check
      _
    $region31: #{tpu_custom_call.1} parent=1 // pred_check_branch
      %69 = sbr.rel (0) target = $region33
    $region32: #{tpu_custom_call.1} parent=1 // pred_region
      %70 = dma.done [#allocation3], 128
    $region33: #{tpu_custom_call.1} parent=1 // pred_fallthru
      _
    // Predicated region
    $region34: #{tpu_custom_call.1} parent=1 // pred_check
      _
    $region35: #{tpu_custom_call.1} parent=1 // pred_check_branch
      %72 = sbr.rel (0) target = $region37
    $region36: #{tpu_custom_call.1} parent=1 // pred_region
      %73 = dma.done [#allocation6], 2048
    $region37: #{tpu_custom_call.1} parent=1 // pred_fallthru
      _
    // Predicated region
    $region38: #{tpu_custom_call.1} parent=1 // pred_check
      _
    $region39: #{tpu_custom_call.1} parent=1 // pred_check_branch
      %75 = sbr.rel (0) target = $region41
    $region40: #{tpu_custom_call.1} parent=1 // pred_region
      %76 = dma.done [#allocation6], 2048
    $region41: #{tpu_custom_call.1} parent=1 // pred_fallthru
      _
    // Predicated region
    $region42: #{tpu_custom_call.1} parent=1 // pred_check
      _
    $region43: #{tpu_custom_call.1} parent=1 // pred_check_branch
      %78 = sbr.rel (0) target = $region45
    $region44: #{tpu_custom_call.1} parent=1 // pred_region
      %79 = dma.done [#allocation9], 2048
    $region45: #{tpu_custom_call.1} parent=1 // pred_fallthru
      _
    %v80 = vld [vmem:[#allocation2] sm:$0xff]
    %v81 = vld [vmem:[#allocation5] sm:$0xff]
    %v82 = vld [vmem:[#allocation5 + $0x8] sm:$0xff]
    %v83 = vld [vmem:[#allocation5 + $0x10] sm:$0xff]
    %v84 = vld [vmem:[#allocation5 + $0x18] sm:$0xff]
    %v85 = vld [vmem:[#allocation5 + $0x20] sm:$0xff]
    %v86 = vld [vmem:[#allocation5 + $0x28] sm:$0xff]
    %v87 = vld [vmem:[#allocation5 + $0x30] sm:$0xff]
    %v88 = vld [vmem:[#allocation5 + $0x38] sm:$0xff]
    %v89 = vld [vmem:[#allocation5 + $0x40] sm:$0xff]
    %v90 = vld [vmem:[#allocation5 + $0x48] sm:$0xff]
    %v91 = vld [vmem:[#allocation5 + $0x50] sm:$0xff]
    %v92 = vld [vmem:[#allocation5 + $0x58] sm:$0xff]
    %v93 = vld [vmem:[#allocation5 + $0x60] sm:$0xff]
    %v94 = vld [vmem:[#allocation5 + $0x68] sm:$0xff]
    %v95 = vld [vmem:[#allocation5 + $0x70] sm:$0xff]
    %v96 = vld [vmem:[#allocation5 + $0x78] sm:$0xff]
    %v97 = vld [vmem:[%s2] sm:$0x1]
    %v99 = vlaneseq
    %v100 = vshrl.u32 %v99, 7
    %v101 = vsub.s32 0, %v100
    %v102 = vrot.slane %v97, %v101
    %104 = vmatprep.subr.mxu0 0.0
    %105 = vmatpush1.msra.mxu0 %v81
    %106 = vmatprep.subr.mxu0 0.0
    %107 = vmatpush1.msra.mxu0 %v82
    %108 = vmatprep.subr.mxu0 0.0
    %109 = vmatpush1.msra.mxu0 %v83
    %110 = vmatprep.subr.mxu0 0.0
    %111 = vmatpush1.msra.mxu0 %v84
    %112 = vmatprep.subr.mxu0 0.0
    %113 = vmatpush1.msra.mxu0 %v85
    %114 = vmatprep.subr.mxu0 0.0
    %115 = vmatpush1.msra.mxu0 %v86
    %116 = vmatprep.subr.mxu0 0.0
    %117 = vmatpush1.msra.mxu0 %v87
    %118 = vmatprep.subr.mxu0 0.0
    %119 = vmatpush1.msra.mxu0 %v88
    %120 = vmatprep.subr.mxu0 0.0
    %121 = vmatpush1.msra.mxu0 %v89
    %122 = vmatprep.subr.mxu0 0.0
    %123 = vmatpush1.msra.mxu0 %v90
    %124 = vmatprep.subr.mxu0 0.0
    %125 = vmatpush1.msra.mxu0 %v91
    %126 = vmatprep.subr.mxu0 0.0
    %127 = vmatpush1.msra.mxu0 %v92
    %128 = vmatprep.subr.mxu0 0.0
    %129 = vmatpush1.msra.mxu0 %v93
    %130 = vmatprep.subr.mxu0 0.0
    %131 = vmatpush1.msra.mxu0 %v94
    %132 = vmatprep.subr.mxu0 0.0
    %133 = vmatpush1.msra.mxu0 %v95
    %134 = vmatprep.subr.mxu0 0.0
    %135 = vmatpush1.msra.mxu0 %v96
    %136 = vmatprep.subr.mxu0 0.0
    %137 = vmatpush1.msra.mxu0 0.0
    %138 = vmatprep.subr.mxu0 0.0
    %139 = vmatpush1.msra.mxu0 0.0
    %140 = vmatprep.subr.mxu0 0.0
    %141 = vmatpush1.msra.mxu0 0.0
    %142 = vmatprep.subr.mxu0 0.0
    %143 = vmatpush1.msra.mxu0 0.0
    %144 = vmatprep.subr.mxu0 0.0
    %145 = vmatpush1.msra.mxu0 0.0
    %146 = vmatprep.subr.mxu0 0.0
    %147 = vmatpush1.msra.mxu0 0.0
    %148 = vmatprep.subr.mxu0 0.0
    %149 = vmatpush1.msra.mxu0 0.0
    %150 = vmatprep.subr.mxu0 0.0
    %151 = vmatpush1.msra.mxu0 0.0
    %152 = vmatprep.subr.mxu0 0.0
    %153 = vmatpush1.msra.mxu0 0.0
    %154 = vmatprep.subr.mxu0 0.0
    %155 = vmatpush1.msra.mxu0 0.0
    %156 = vmatprep.subr.mxu0 0.0
    %157 = vmatpush1.msra.mxu0 0.0
    %158 = vmatprep.subr.mxu0 0.0
    %159 = vmatpush1.msra.mxu0 0.0
    %160 = vmatprep.subr.mxu0 0.0
    %161 = vmatpush1.msra.mxu0 0.0
    %162 = vmatprep.subr.mxu0 0.0
    %163 = vmatpush1.msra.mxu0 0.0
    %164 = vmatprep.subr.mxu0 0.0
    %165 = vmatpush1.msra.mxu0 0.0
    %166 = vmatprep.subr.mxu0 0.0
    %167 = vmatpush1.msra.mxu0 0.0
    %168 = vmatprep.mubr.f32.mxu0 0.0
    %169 = vmatmul.mubr.f32.gmra.mrb[0].mxu0 %v80
    %v170 = vpop.f32.mrb[0].mxu0
    %v171 = vadd.f32 %v102, %v170
    %v172 = vpop.f32.mrb[0].mxu0
    %173 = vdwg.mxu0
    %v174 = vmul.f32 %v171, 0.15
    %v175 = vmax.f32 %v171, %v174
    %v176 = vld [vmem:[#allocation7] sm:$0xff]
    %v177 = vld [vmem:[#allocation7 + $0x8] sm:$0xff]
    %v178 = vld [vmem:[#allocation7 + $0x10] sm:$0xff]
    %v179 = vld [vmem:[#allocation7 + $0x18] sm:$0xff]
    %v180 = vld [vmem:[#allocation7 + $0x20] sm:$0xff]
    %v181 = vld [vmem:[#allocation7 + $0x28] sm:$0xff]
    %v182 = vld [vmem:[#allocation7 + $0x30] sm:$0xff]
    %v183 = vld [vmem:[#allocation7 + $0x38] sm:$0xff]
    %v184 = vld [vmem:[#allocation7 + $0x40] sm:$0xff]
    %v185 = vld [vmem:[#allocation7 + $0x48] sm:$0xff]
    %v186 = vld [vmem:[#allocation7 + $0x50] sm:$0xff]
    %v187 = vld [vmem:[#allocation7 + $0x58] sm:$0xff]
    %v188 = vld [vmem:[#allocation7 + $0x60] sm:$0xff]
    %v189 = vld [vmem:[#allocation7 + $0x68] sm:$0xff]
    %v190 = vld [vmem:[#allocation7 + $0x70] sm:$0xff]
    %v191 = vld [vmem:[#allocation7 + $0x78] sm:$0xff]
    %v192 = vld [vmem:[%s4] sm:$0x1]
    %v194 = vlaneseq
    %v195 = vshrl.u32 %v194, 7
    %v196 = vsub.s32 0, %v195
    %v197 = vrot.slane %v192, %v196
    %199 = vmatprep.subr.mxu0 0.0
    %200 = vmatpush1.msra.mxu0 %v176
    %201 = vmatprep.subr.mxu0 0.0
    %202 = vmatpush1.msra.mxu0 %v177
    %203 = vmatprep.subr.mxu0 0.0
    %204 = vmatpush1.msra.mxu0 %v178
    %205 = vmatprep.subr.mxu0 0.0
    %206 = vmatpush1.msra.mxu0 %v179
    %207 = vmatprep.subr.mxu0 0.0
    %208 = vmatpush1.msra.mxu0 %v180
    %209 = vmatprep.subr.mxu0 0.0
    %210 = vmatpush1.msra.mxu0 %v181
    %211 = vmatprep.subr.mxu0 0.0
    %212 = vmatpush1.msra.mxu0 %v182
    %213 = vmatprep.subr.mxu0 0.0
    %214 = vmatpush1.msra.mxu0 %v183
    %215 = vmatprep.subr.mxu0 0.0
    %216 = vmatpush1.msra.mxu0 %v184
    %217 = vmatprep.subr.mxu0 0.0
    %218 = vmatpush1.msra.mxu0 %v185
    %219 = vmatprep.subr.mxu0 0.0
    %220 = vmatpush1.msra.mxu0 %v186
    %221 = vmatprep.subr.mxu0 0.0
    %222 = vmatpush1.msra.mxu0 %v187
    %223 = vmatprep.subr.mxu0 0.0
    %224 = vmatpush1.msra.mxu0 %v188
    %225 = vmatprep.subr.mxu0 0.0
    %226 = vmatpush1.msra.mxu0 %v189
    %227 = vmatprep.subr.mxu0 0.0
    %228 = vmatpush1.msra.mxu0 %v190
    %229 = vmatprep.subr.mxu0 0.0
    %230 = vmatpush1.msra.mxu0 %v191
    %231 = vmatprep.subr.mxu0 0.0
    %232 = vmatpush1.msra.mxu0 0.0
    %233 = vmatprep.subr.mxu0 0.0
    %234 = vmatpush1.msra.mxu0 0.0
    %235 = vmatprep.subr.mxu0 0.0
    %236 = vmatpush1.msra.mxu0 0.0
    %237 = vmatprep.subr.mxu0 0.0
    %238 = vmatpush1.msra.mxu0 0.0
    %239 = vmatprep.subr.mxu0 0.0
    %240 = vmatpush1.msra.mxu0 0.0
    %241 = vmatprep.subr.mxu0 0.0
    %242 = vmatpush1.msra.mxu0 0.0
    %243 = vmatprep.subr.mxu0 0.0
    %244 = vmatpush1.msra.mxu0 0.0
    %245 = vmatprep.subr.mxu0 0.0
    %246 = vmatpush1.msra.mxu0 0.0
    %247 = vmatprep.subr.mxu0 0.0
    %248 = vmatpush1.msra.mxu0 0.0
    %249 = vmatprep.subr.mxu0 0.0
    %250 = vmatpush1.msra.mxu0 0.0
    %251 = vmatprep.subr.mxu0 0.0
    %252 = vmatpush1.msra.mxu0 0.0
    %253 = vmatprep.subr.mxu0 0.0
    %254 = vmatpush1.msra.mxu0 0.0
    %255 = vmatprep.subr.mxu0 0.0
    %256 = vmatpush1.msra.mxu0 0.0
    %257 = vmatprep.subr.mxu0 0.0
    %258 = vmatpush1.msra.mxu0 0.0
    %259 = vmatprep.subr.mxu0 0.0
    %260 = vmatpush1.msra.mxu0 0.0
    %261 = vmatprep.subr.mxu0 0.0
    %262 = vmatpush1.msra.mxu0 0.0
    %263 = vmatprep.mubr.f32.mxu0 0.0
    %264 = vmatmul.mubr.f32.gmra.mrb[0].mxu0 %v175
    %v265 = vpop.f32.mrb[0].mxu0
    %v266 = vadd.f32 %v197, %v265
    %v267 = vpop.f32.mrb[0].mxu0
    %268 = vdwg.mxu0
    %v269 = vmul.f32 %v266, 0.15
    %v270 = vmax.f32 %v266, %v269
    %v271 = vld [vmem:[#allocation8] sm:$0xff]
    %v272 = vld [vmem:[#allocation8 + $0x8] sm:$0xff]
    %v273 = vld [vmem:[#allocation8 + $0x10] sm:$0xff]
    %v274 = vld [vmem:[#allocation8 + $0x18] sm:$0xff]
    %v275 = vld [vmem:[#allocation8 + $0x20] sm:$0xff]
    %v276 = vld [vmem:[#allocation8 + $0x28] sm:$0xff]
    %v277 = vld [vmem:[#allocation8 + $0x30] sm:$0xff]
    %v278 = vld [vmem:[#allocation8 + $0x38] sm:$0xff]
    %v279 = vld [vmem:[#allocation8 + $0x40] sm:$0xff]
    %v280 = vld [vmem:[#allocation8 + $0x48] sm:$0xff]
    %v281 = vld [vmem:[#allocation8 + $0x50] sm:$0xff]
    %v282 = vld [vmem:[#allocation8 + $0x58] sm:$0xff]
    %v283 = vld [vmem:[#allocation8 + $0x60] sm:$0xff]
    %v284 = vld [vmem:[#allocation8 + $0x68] sm:$0xff]
    %v285 = vld [vmem:[#allocation8 + $0x70] sm:$0xff]
    %v286 = vld [vmem:[#allocation8 + $0x78] sm:$0xff]
    %v287 = vld [vmem:[%s6] sm:$0x1]
    %v289 = vlaneseq
    %v290 = vshrl.u32 %v289, 7
    %v291 = vsub.s32 0, %v290
    %v292 = vrot.slane %v287, %v291
    %294 = vmatprep.subr.mxu0 0.0
    %295 = vmatpush1.msra.mxu0 %v271
    %296 = vmatprep.subr.mxu0 0.0
    %297 = vmatpush1.msra.mxu0 %v272
    %298 = vmatprep.subr.mxu0 0.0
    %299 = vmatpush1.msra.mxu0 %v273
    %300 = vmatprep.subr.mxu0 0.0
    %301 = vmatpush1.msra.mxu0 %v274
    %302 = vmatprep.subr.mxu0 0.0
    %303 = vmatpush1.msra.mxu0 %v275
    %304 = vmatprep.subr.mxu0 0.0
    %305 = vmatpush1.msra.mxu0 %v276
    %306 = vmatprep.subr.mxu0 0.0
    %307 = vmatpush1.msra.mxu0 %v277
    %308 = vmatprep.subr.mxu0 0.0
    %309 = vmatpush1.msra.mxu0 %v278
    %310 = vmatprep.subr.mxu0 0.0
    %311 = vmatpush1.msra.mxu0 %v279
    %312 = vmatprep.subr.mxu0 0.0
    %313 = vmatpush1.msra.mxu0 %v280
    %314 = vmatprep.subr.mxu0 0.0
    %315 = vmatpush1.msra.mxu0 %v281
    %316 = vmatprep.subr.mxu0 0.0
    %317 = vmatpush1.msra.mxu0 %v282
    %318 = vmatprep.subr.mxu0 0.0
    %319 = vmatpush1.msra.mxu0 %v283
    %320 = vmatprep.subr.mxu0 0.0
    %321 = vmatpush1.msra.mxu0 %v284
    %322 = vmatprep.subr.mxu0 0.0
    %323 = vmatpush1.msra.mxu0 %v285
    %324 = vmatprep.subr.mxu0 0.0
    %325 = vmatpush1.msra.mxu0 %v286
    %326 = vmatprep.subr.mxu0 0.0
    %327 = vmatpush1.msra.mxu0 0.0
    %328 = vmatprep.subr.mxu0 0.0
    %329 = vmatpush1.msra.mxu0 0.0
    %330 = vmatprep.subr.mxu0 0.0
    %331 = vmatpush1.msra.mxu0 0.0
    %332 = vmatprep.subr.mxu0 0.0
    %333 = vmatpush1.msra.mxu0 0.0
    %334 = vmatprep.subr.mxu0 0.0
    %335 = vmatpush1.msra.mxu0 0.0
    %336 = vmatprep.subr.mxu0 0.0
    %337 = vmatpush1.msra.mxu0 0.0
    %338 = vmatprep.subr.mxu0 0.0
    %339 = vmatpush1.msra.mxu0 0.0
    %340 = vmatprep.subr.mxu0 0.0
    %341 = vmatpush1.msra.mxu0 0.0
    %342 = vmatprep.subr.mxu0 0.0
    %343 = vmatpush1.msra.mxu0 0.0
    %344 = vmatprep.subr.mxu0 0.0
    %345 = vmatpush1.msra.mxu0 0.0
    %346 = vmatprep.subr.mxu0 0.0
    %347 = vmatpush1.msra.mxu0 0.0
    %348 = vmatprep.subr.mxu0 0.0
    %349 = vmatpush1.msra.mxu0 0.0
    %350 = vmatprep.subr.mxu0 0.0
    %351 = vmatpush1.msra.mxu0 0.0
    %352 = vmatprep.subr.mxu0 0.0
    %353 = vmatpush1.msra.mxu0 0.0
    %354 = vmatprep.subr.mxu0 0.0
    %355 = vmatpush1.msra.mxu0 0.0
    %356 = vmatprep.subr.mxu0 0.0
    %357 = vmatpush1.msra.mxu0 0.0
    %358 = vmatprep.mubr.f32.mxu0 0.0
    %359 = vmatmul.mubr.f32.gmra.mrb[0].mxu0 %v270
    %v360 = vpop.f32.mrb[0].mxu0
    %v361 = vadd.f32 %v292, %v360
    %v362 = vpop.f32.mrb[0].mxu0
    %363 = vdwg.mxu0
    %v364 = vsub.f32 0.0, %v361
    %v365 = vmul.f32 %v364, 1.442695
    %v366 = vpow.pop %v365
    %v367 = vadd.f32 %v366, 1.0
    %v368 = vrcp.pop %v367
    %369 = vst [vmem:[#allocation10] sm:$0xff] %v368
    // Predicated region
    $region46: #{tpu_custom_call.1} parent=1 // pred_check
      _
    $region47: #{tpu_custom_call.1} parent=1 // pred_check_branch
      %371 = sbr.rel (0) target = $region49
    $region48: #{tpu_custom_call.1} parent=1 // pred_region
      %s373 = ssub.s32 128, 128
      %374 = vsyncadd [#allocation4], %s373
      %s376 = sshll.u32 [#allocation10], 4
      %s377 = int_to_ptr.vmem [resolvable:$true] %s376
      %379 = dma.vmem_to_hbm [thread:$0]  %s377, 128, %s7, [#allocation4]
    $region49: #{tpu_custom_call.1} parent=1 // pred_fallthru
      _
    // Predicated region
    $region50: #{tpu_custom_call.1} parent=1 // pred_check
      _
    $region51: #{tpu_custom_call.1} parent=1 // pred_check_branch
      %381 = sbr.rel (0) target = $region53
    $region52: #{tpu_custom_call.1} parent=1 // pred_region
      %382 = dma.done [#allocation4], 128
    $region53: #{tpu_custom_call.1} parent=1 // pred_fallthru
      _
    %383 = vsyncpa [#allocation3], 1
    %384 = vsyncpa [#allocation6], 1
    %385 = vsyncpa [#allocation9], 1
    %386 = vsyncpa [#allocation4], 1

</llo_original>
